<compile_context>
chip_gen: v5e
topology: v5e:2x2
jax: 0.10.0
libtpu: 0.0.40
codegen_flags: <defaults>
</compile_context>

<pallas_src>
import functools

import jax
import jax.numpy as jnp
import numpy as np
from jax.experimental import pallas as pl
from jax.experimental.pallas import tpu as pltpu

# ---------------- module constants ----------------
L1_PA = 64 + 1          # 65
L2 = 8
L3 = 32
MAX_PLY = 60

COUNT = 4                           # number of layer-stack buckets
BUCKET_SIZE = MAX_PLY // COUNT      # 15

QUANTIZED_ONE = 127.0
WEIGHT_SCALE_HIDDEN = 64.0
WEIGHT_SCALE_OUT = 16.0
SCORE_SCALE = 400.0

# Reciprocal constants (used identically in kernel and reference).
INV_QUANTIZED_ONE = 1.0 / QUANTIZED_ONE
INV_SCORE_SCALE = 1.0 / SCORE_SCALE


# ---------------- Pallas kernel ----------------
def _layer_stacks_kernel(idx_ref, x_ref, w1_ref, b1_ref, w2aug_ref,
                         w3_ref, b3_ref, out_ref, *,
                         q_one, inv_q_one, score_scale, inv_score_scale):
    f32 = jnp.float32
    idx = idx_ref[...]                          # (1, tb) int32 bucket per sample
    x_blk = x_ref[...]                          # (tb, L1_PA) f32, natural layout

    # One-hot per-bucket lane masks, built once on the VPU and reused for the
    # layer-1 fold, the layer-2 K-fold and the final bucket pick.
    masks = [(idx == c).astype(f32) for c in range(COUNT)]       # each (1, tb)
    mask_stack = jnp.concatenate(masks, axis=0)                  # (COUNT, tb)

    def fq_floor(v):                            # activation fake-quant (floor)
        return jnp.floor(v * q_one) * inv_q_one

    # ---- layer 1: (COUNT*L2, tb) = w1(32,65) contracted with x(tb,65) on the
    # shared 65-dim (trans-B dot; no wrapper/HBM transpose of x needed). ----
    l1 = jax.lax.dot_general(
        w1_ref[...], x_blk, (((1,), (1,)), ((), ())),
        preferred_element_type=f32) + b1_ref[...]
    # Bucket fold on the (32, tb) pre-activation; slices are 8-sublane aligned.
    l1s = None
    for c in range(COUNT):
        part = l1[c * L2:(c + 1) * L2, :] * masks[c]
        l1s = part if l1s is None else l1s + part
    l1a = fq_floor(jnp.clip(l1s, 0.0, 1.0))                      # (L2, tb)

    # ---- layer 2: mask-then-GEMM with bias folded into the K dimension ----
    #   A     = [l1a*m0; l1a*m1; l1a*m2; l1a*m3; m0..m3]   (COUNT*(L2+1), tb)
    #   W2aug = [w2_0|w2_1|w2_2|w2_3 | b2_0|b2_1|b2_2|b2_3]       (L3, 36)
    #   W2aug @ A == select(w2 @ l1a + b2, L3)   (moves the fold onto the MXU)
    a_mat = jnp.concatenate([l1a * m for m in masks] + [mask_stack], axis=0)
    l2s = jnp.dot(w2aug_ref[...], a_mat, preferred_element_type=f32)  # (L3, tb)
    l2a = fq_floor(jnp.clip(l2s, 0.0, 1.0))                      # (L3, tb)

    # ---- output: (COUNT, tb) = w3(4,32) @ l2a(32,tb); pick via mask_stack ----
    l3 = jnp.dot(w3_ref[...], l2a, preferred_element_type=f32) + b3_ref[...]
    sel3 = jnp.sum(l3 * mask_stack, axis=0, keepdims=True)       # (1, tb)

    # Lane-dense (1, 1, tb) store (full rows of lanes, unmasked vst).
    out_ref[...] = (jnp.floor(sel3 * score_scale) * inv_score_scale)[None]


# ---------------- wrapper ----------------
def _pick_tb(batch):
    """Largest lane-aligned batch tile <= 4096, preferring an even grid >= 4."""
    if batch % 128 != 0:
        return batch                       # single whole-batch block
    cands = (4096, 2048, 1024, 512, 256, 128)
    for cand in cands:                     # even grid of >= 4 steps (v7x)
        n = batch // cand
        if batch % cand == 0 and n >= 4 and n % 2 == 0:
            return cand
    for cand in cands:                     # any grid of >= 4 steps
        if batch % cand == 0 and batch // cand >= 4:
            return cand
    return batch                           # small batch: one whole-batch block


def layer_stacks_forward(x_pa, ply, params, *, tb=None):
    """x_pa: (B, L1_PA) f32, ply: (B, 1) int32. Returns (B, 1) f32."""
    w1, b1, w2, b2, w3, b3 = params        # PyTorch (out,in) weights, (out,1) biases
    B = x_pa.shape[0]
    if tb is None:
        tb = _pick_tb(B)
    if B % tb != 0:
        raise ValueError(f"batch {B} must be divisible by tb {tb}")
    if tb % 128 != 0 and tb != B:
        raise ValueError("tb must be a multiple of 128 lanes or the whole batch")
    grid_n = B // tb

    # Bucket index per sample as a lane-dense (1, B) int32 row, clamped so an
    # out-of-range ply cannot silently zero every bucket mask.
    ls_idx = jnp.clip(ply.reshape(1, B) // BUCKET_SIZE, 0, COUNT - 1).astype(jnp.int32)

    # Fold b2 into w2 along the K axis of the layer-2 GEMM (see kernel):
    # columns [c*L2:(c+1)*L2] = w2 bucket c, column COUNT*L2 + c = b2 bucket c.
    w2_cols = jnp.transpose(w2.reshape(COUNT, L3, L2), (1, 0, 2)).reshape(L3, COUNT * L2)
    b2_cols = jnp.transpose(b2.reshape(COUNT, L3))               # (L3, COUNT)
    w2aug = jnp.concatenate([w2_cols, b2_cols], axis=1)          # (L3, COUNT*(L2+1))

    kern = functools.partial(
        _layer_stacks_kernel,
        q_one=QUANTIZED_ONE, inv_q_one=INV_QUANTIZED_ONE,
        score_scale=SCORE_SCALE, inv_score_scale=INV_SCORE_SCALE)

    batch_rows = lambda i: (i, 0)
    batch_cols = lambda i: (0, i)
    whole = lambda i: (0, 0)

    out = pl.pallas_call(
        kern,
        out_shape=jax.ShapeDtypeStruct((grid_n, 1, tb), jnp.float32),
        grid=(grid_n,),
        in_specs=[
            pl.BlockSpec((1, tb), batch_cols),                 # bucket index row
            pl.BlockSpec((tb, L1_PA), batch_rows),             # x block (natural layout)
            pl.BlockSpec((COUNT * L2, L1_PA), whole),          # w1    (32, 65)
            pl.BlockSpec((COUNT * L2, 1), whole),              # b1    (32, 1)
            pl.BlockSpec((L3, COUNT * (L2 + 1)), whole),       # w2aug (32, 36)
            pl.BlockSpec((COUNT, L3), whole),                  # w3    (4, 32)
            pl.BlockSpec((COUNT, 1), whole),                   # b3    (4, 1)
        ],
        out_specs=pl.BlockSpec((1, 1, tb), lambda i: (i, 0, 0)),
        compiler_params=pltpu.CompilerParams(
            dimension_semantics=("parallel",)),
    )(ls_idx, x_pa, w1, b1, w2aug, w3, b3)

    # out[g, 0, t] is sample g*tb + t -> row-major reshape restores (B, 1).
    return out.reshape(B, 1)


# ---------------- deterministic parameter construction ----------------
def _fq_round(x, scale):
    return jnp.round(x * scale) / scale


def make_params(key):
    """Replicates LayerStacks.__init__/_init_layers: bucket-0 weights copied to
    every bucket; output bias zero.  Weights returned already fake-quantized
    (FakeQuantizeLinear weight path), in PyTorch (out, in) layout; biases as
    (out, 1) columns (lane-broadcast-friendly for the kernel)."""
    k1, k2, k3, k4, k5 = jax.random.split(key, 5)

    def uinit(k, shape, fan_in):
        bound = 1.0 / np.sqrt(fan_in)
        return jax.random.uniform(k, shape, jnp.float32, -bound, bound)

    # bucket-0 parameters (PyTorch layout: (out, in))
    w1_0 = uinit(k1, (L2, L1_PA), L1_PA)
    b1_0 = uinit(k2, (L2,), L1_PA)
    w2_0 = uinit(k3, (L3, L2), L2)
    b2_0 = uinit(k4, (L3,), L2)
    w3_0 = uinit(k5, (1, L3), L3)

    # replicate bucket 0 across all COUNT buckets (as _init_layers does)
    w1 = jnp.tile(w1_0, (COUNT, 1))           # (COUNT*L2, L1_PA)
    b1 = jnp.tile(b1_0, (COUNT,))             # (COUNT*L2,)
    w2 = jnp.tile(w2_0, (COUNT, 1))           # (COUNT*L3, L2)
    b2 = jnp.tile(b2_0, (COUNT,))             # (COUNT*L3,)
    w3 = jnp.tile(w3_0, (COUNT, 1))           # (COUNT, L3)
    b3 = jnp.zeros((COUNT,), jnp.float32)     # output bias filled with 0

    # fake-quantize weights / biases (assumed FakeQuantizeLinear behaviour)
    ws_h = WEIGHT_SCALE_HIDDEN
    ws_o = SCORE_SCALE * WEIGHT_SCALE_OUT / QUANTIZED_ONE
    w1q = _fq_round(w1, ws_h)
    b1q = _fq_round(b1, ws_h * QUANTIZED_ONE)
    w2q = _fq_round(w2, ws_h)
    b2q = _fq_round(b2, ws_h * QUANTIZED_ONE)
    w3q = _fq_round(w3, ws_o)
    b3q = _fq_round(b3, SCORE_SCALE * WEIGHT_SCALE_OUT)

    return (w1q, b1q.reshape(-1, 1),
            w2q, b2q.reshape(-1, 1),
            w3q, b3q.reshape(-1, 1))


# ---------------- pure-JAX reference (mirrors the torch forward) ----------------
def reference_forward(x_pa, ply, params):
    w1, b1, w2, b2, w3, b3 = params           # (out, in) weights, (out, 1) biases
    B = x_pa.shape[0]
    ls = jnp.clip(ply.reshape(-1) // BUCKET_SIZE, 0, COUNT - 1).astype(jnp.int32)
    idx = ls + jnp.arange(B, dtype=jnp.int32) * COUNT

    l1 = (x_pa @ w1.T + b1.reshape(1, -1)).reshape(-1, L2)[idx]
    l1 = jnp.floor(jnp.clip(l1, 0.0, 1.0) * QUANTIZED_ONE) * INV_QUANTIZED_ONE
    l2 = (l1 @ w2.T + b2.reshape(1, -1)).reshape(-1, L3)[idx]
    l2 = jnp.floor(jnp.clip(l2, 0.0, 1.0) * QUANTIZED_ONE) * INV_QUANTIZED_ONE
    l3 = (l2 @ w3.T + b3.reshape(1, -1)).reshape(-1, 1)[idx]
    return jnp.floor(l3 * SCORE_SCALE) * INV_SCORE_SCALE


if __name__ == "__main__":
    key = jax.random.PRNGKey(0)
    kp, kx, kply = jax.random.split(key, 3)

    # B=512 -> _pick_tb gives tb=128, grid=4: exercises the multi-step
    # pipeline and gives each v7x TensorCore >= 2 steps to overlap.
    # Real workloads pick tb up to 4096 automatically.
    B = 512
    params = make_params(kp)
    # x_pa is the pawn-attack accumulator slice; values in [0, 1] like the
    # clamped accumulator the real model feeds in.
    x_pa = jax.random.uniform(kx, (B, L1_PA), jnp.float32, 0.0, 1.0)
    ply = jax.random.randint(kply, (B, 1), 0, MAX_PLY, dtype=jnp.int32)

    out = layer_stacks_forward(x_pa, ply, params)
    out = jax.block_until_ready(out)

    ref = jax.block_until_ready(reference_forward(x_pa, ply, params))

    assert out.shape == (B, 1), out.shape
    # Tolerance: a couple of output quantization steps (1/SCORE_SCALE); MXU vs
    # XLA accumulation-order ulp differences (trans-B dot, bias folded into the
    # layer-2 GEMM) can, for isolated elements, flip an intermediate fake-quant
    # floor by one step.
    np.testing.assert_allclose(np.asarray(out), np.asarray(ref),
                               atol=2.5 / SCORE_SCALE, rtol=0)
    print("KERNEL_OK")
</pallas_src>

<mosaic_0001>
module attributes {stable_mosaic.version = 11 : i64} {
  func.func @_layer_stacks_kernel(%arg0: i32, %arg1: memref<1x128xi32, #tpu.memory_space<vmem>>, %arg2: memref<128x65xf32, #tpu.memory_space<vmem>>, %arg3: memref<32x65xf32, #tpu.memory_space<vmem>>, %arg4: memref<32x1xf32, #tpu.memory_space<vmem>>, %arg5: memref<32x36xf32, #tpu.memory_space<vmem>>, %arg6: memref<4x32xf32, #tpu.memory_space<vmem>>, %arg7: memref<4x1xf32, #tpu.memory_space<vmem>>, %arg8: memref<1x1x128xf32, #tpu.memory_space<vmem>>) attributes {dimension_semantics = [#tpu.dimension_semantics<parallel>], iteration_bounds = array<i64: 4>, scalar_prefetch = 0 : i64, scratch_operands = 0 : i64, tpu.core_type = #tpu.core_type<tc>, window_params = [{transform_indices = @transform_0, window_bounds = array<i64: 1, 128>}, {transform_indices = @transform_1, window_bounds = array<i64: 128, 65>}, {pipeline_mode = #tpu.pipeline_mode<synchronous>, transform_indices = @transform_2, window_bounds = array<i64: 32, 65>}, {pipeline_mode = #tpu.pipeline_mode<synchronous>, transform_indices = @transform_3, window_bounds = array<i64: 32, 1>}, {pipeline_mode = #tpu.pipeline_mode<synchronous>, transform_indices = @transform_4, window_bounds = array<i64: 32, 36>}, {pipeline_mode = #tpu.pipeline_mode<synchronous>, transform_indices = @transform_5, window_bounds = array<i64: 4, 32>}, {pipeline_mode = #tpu.pipeline_mode<synchronous>, transform_indices = @transform_6, window_bounds = array<i64: 4, 1>}, {transform_indices = @transform_7, window_bounds = array<i64: 1, 1, 128>}]} {
    %c0 = arith.constant 0 : index
    %c0_0 = arith.constant 0 : index
    %0 = vector.load %arg1[%c0, %c0_0] : memref<1x128xi32, #tpu.memory_space<vmem>>, vector<1x128xi32>
    %c0_1 = arith.constant 0 : index
    %c0_2 = arith.constant 0 : index
    %1 = vector.load %arg2[%c0_1, %c0_2] : memref<128x65xf32, #tpu.memory_space<vmem>>, vector<128x65xf32>
    %c0_i32 = arith.constant 0 : i32
    %2 = vector.broadcast %c0_i32 : i32 to vector<1x128xi32>
    %3 = arith.cmpi eq, %0, %2 : vector<1x128xi32>
    %4 = arith.extui %3 : vector<1x128xi1> to vector<1x128xi32>
    %5 = arith.sitofp %4 : vector<1x128xi32> to vector<1x128xf32>
    %c1_i32 = arith.constant 1 : i32
    %6 = vector.broadcast %c1_i32 : i32 to vector<1x128xi32>
    %7 = arith.cmpi eq, %0, %6 : vector<1x128xi32>
    %8 = arith.extui %7 : vector<1x128xi1> to vector<1x128xi32>
    %9 = arith.sitofp %8 : vector<1x128xi32> to vector<1x128xf32>
    %c2_i32 = arith.constant 2 : i32
    %10 = vector.broadcast %c2_i32 : i32 to vector<1x128xi32>
    %11 = arith.cmpi eq, %0, %10 : vector<1x128xi32>
    %12 = arith.extui %11 : vector<1x128xi1> to vector<1x128xi32>
    %13 = arith.sitofp %12 : vector<1x128xi32> to vector<1x128xf32>
    %c3_i32 = arith.constant 3 : i32
    %14 = vector.broadcast %c3_i32 : i32 to vector<1x128xi32>
    %15 = arith.cmpi eq, %0, %14 : vector<1x128xi32>
    %16 = arith.extui %15 : vector<1x128xi1> to vector<1x128xi32>
    %17 = arith.sitofp %16 : vector<1x128xi32> to vector<1x128xf32>
    %18 = tpu.concatenate %5, %9, %13, %17 in 0 : vector<1x128xf32>, vector<1x128xf32>, vector<1x128xf32>, vector<1x128xf32> -> vector<4x128xf32>
    %c0_3 = arith.constant 0 : index
    %c0_4 = arith.constant 0 : index
    %19 = vector.load %arg3[%c0_3, %c0_4] : memref<32x65xf32, #tpu.memory_space<vmem>>, vector<32x65xf32>
    %cst = arith.constant dense<0.000000e+00> : vector<32x128xf32>
    %20 = tpu.matmul %19, %1, %cst {dimension_numbers = #tpu.dot_dimension_numbers<[1], [1], [0], [0], [0, 0, 1, 0], [], []>} : vector<32x65xf32>, vector<128x65xf32>, vector<32x128xf32> -> vector<32x128xf32>
    %c0_5 = arith.constant 0 : index
    %c0_6 = arith.constant 0 : index
    %21 = vector.load %arg4[%c0_5, %c0_6] : memref<32x1xf32, #tpu.memory_space<vmem>>, vector<32x1xf32>
    %22 = vector.broadcast %21 : vector<32x1xf32> to vector<32x128xf32>
    %23 = arith.addf %20, %22 : vector<32x128xf32>
    %24 = vector.extract_strided_slice %23 {offsets = [0, 0], sizes = [8, 128], strides = [1, 1]} : vector<32x128xf32> to vector<8x128xf32>
    %25 = vector.broadcast %5 : vector<1x128xf32> to vector<8x128xf32>
    %26 = arith.mulf %24, %25 : vector<8x128xf32>
    %27 = vector.extract_strided_slice %23 {offsets = [8, 0], sizes = [8, 128], strides = [1, 1]} : vector<32x128xf32> to vector<8x128xf32>
    %28 = vector.broadcast %9 : vector<1x128xf32> to vector<8x128xf32>
    %29 = arith.mulf %27, %28 : vector<8x128xf32>
    %30 = arith.addf %26, %29 : vector<8x128xf32>
    %31 = vector.extract_strided_slice %23 {offsets = [16, 0], sizes = [8, 128], strides = [1, 1]} : vector<32x128xf32> to vector<8x128xf32>
    %32 = vector.broadcast %13 : vector<1x128xf32> to vector<8x128xf32>
    %33 = arith.mulf %31, %32 : vector<8x128xf32>
    %34 = arith.addf %30, %33 : vector<8x128xf32>
    %35 = vector.extract_strided_slice %23 {offsets = [24, 0], sizes = [8, 128], strides = [1, 1]} : vector<32x128xf32> to vector<8x128xf32>
    %36 = vector.broadcast %17 : vector<1x128xf32> to vector<8x128xf32>
    %37 = arith.mulf %35, %36 : vector<8x128xf32>
    %38 = arith.addf %34, %37 : vector<8x128xf32>
    %cst_7 = arith.constant 0.000000e+00 : f32
    %cst_8 = arith.constant 1.000000e+00 : f32
    %39 = vector.broadcast %cst_7 : f32 to vector<8x128xf32>
    %40 = arith.maximumf %39, %38 : vector<8x128xf32>
    %41 = vector.broadcast %cst_8 : f32 to vector<8x128xf32>
    %42 = arith.minimumf %41, %40 : vector<8x128xf32>
    %cst_9 = arith.constant 1.270000e+02 : f32
    %43 = vector.broadcast %cst_9 : f32 to vector<8x128xf32>
    %44 = arith.mulf %42, %43 : vector<8x128xf32>
    %45 = math.floor %44 : vector<8x128xf32>
    %cst_10 = arith.constant 0.00787401571 : f32
    %46 = vector.broadcast %cst_10 : f32 to vector<8x128xf32>
    %47 = arith.mulf %45, %46 : vector<8x128xf32>
    %48 = vector.broadcast %5 : vector<1x128xf32> to vector<8x128xf32>
    %49 = arith.mulf %47, %48 : vector<8x128xf32>
    %50 = vector.broadcast %9 : vector<1x128xf32> to vector<8x128xf32>
    %51 = arith.mulf %47, %50 : vector<8x128xf32>
    %52 = vector.broadcast %13 : vector<1x128xf32> to vector<8x128xf32>
    %53 = arith.mulf %47, %52 : vector<8x128xf32>
    %54 = vector.broadcast %17 : vector<1x128xf32> to vector<8x128xf32>
    %55 = arith.mulf %47, %54 : vector<8x128xf32>
    %56 = tpu.concatenate %49, %51, %53, %55, %18 in 0 : vector<8x128xf32>, vector<8x128xf32>, vector<8x128xf32>, vector<8x128xf32>, vector<4x128xf32> -> vector<36x128xf32>
    %c0_11 = arith.constant 0 : index
    %c0_12 = arith.constant 0 : index
    %57 = vector.load %arg5[%c0_11, %c0_12] : memref<32x36xf32, #tpu.memory_space<vmem>>, vector<32x36xf32>
    %cst_13 = arith.constant dense<0.000000e+00> : vector<32x128xf32>
    %58 = tpu.matmul %57, %56, %cst_13 {dimension_numbers = #tpu.dot_dimension_numbers<[1], [0], [0], [1], [0, 0, 1, 1], [], []>} : vector<32x36xf32>, vector<36x128xf32>, vector<32x128xf32> -> vector<32x128xf32>
    %cst_14 = arith.constant 0.000000e+00 : f32
    %cst_15 = arith.constant 1.000000e+00 : f32
    %59 = vector.broadcast %cst_14 : f32 to vector<32x128xf32>
    %60 = arith.maximumf %59, %58 : vector<32x128xf32>
    %61 = vector.broadcast %cst_15 : f32 to vector<32x128xf32>
    %62 = arith.minimumf %61, %60 : vector<32x128xf32>
    %cst_16 = arith.constant 1.270000e+02 : f32
    %63 = vector.broadcast %cst_16 : f32 to vector<32x128xf32>
    %64 = arith.mulf %62, %63 : vector<32x128xf32>
    %65 = math.floor %64 : vector<32x128xf32>
    %cst_17 = arith.constant 0.00787401571 : f32
    %66 = vector.broadcast %cst_17 : f32 to vector<32x128xf32>
    %67 = arith.mulf %65, %66 : vector<32x128xf32>
    %c0_18 = arith.constant 0 : index
    %c0_19 = arith.constant 0 : index
    %68 = vector.load %arg6[%c0_18, %c0_19] : memref<4x32xf32, #tpu.memory_space<vmem>>, vector<4x32xf32>
    %cst_20 = arith.constant dense<0.000000e+00> : vector<4x128xf32>
    %69 = tpu.matmul %68, %67, %cst_20 {dimension_numbers = #tpu.dot_dimension_numbers<[1], [0], [0], [1], [0, 0, 1, 1], [], []>} : vector<4x32xf32>, vector<32x128xf32>, vector<4x128xf32> -> vector<4x128xf32>
    %c0_21 = arith.constant 0 : index
    %c0_22 = arith.constant 0 : index
    %70 = vector.load %arg7[%c0_21, %c0_22] : memref<4x1xf32, #tpu.memory_space<vmem>>, vector<4x1xf32>
    %71 = vector.broadcast %70 : vector<4x1xf32> to vector<4x128xf32>
    %72 = arith.addf %69, %71 : vector<4x128xf32>
    %73 = arith.mulf %72, %18 : vector<4x128xf32>
    %cst_23 = arith.constant dense<0.000000e+00> : vector<128xf32>
    %74 = vector.multi_reduction <add>, %73, %cst_23 [0] : vector<4x128xf32> to vector<128xf32>
    %75 = vector.shape_cast %74 : vector<128xf32> to vector<1x128xf32>
    %cst_24 = arith.constant 4.000000e+02 : f32
    %76 = vector.broadcast %cst_24 : f32 to vector<1x128xf32>
    %77 = arith.mulf %75, %76 : vector<1x128xf32>
    %78 = math.floor %77 : vector<1x128xf32>
    %cst_25 = arith.constant 2.500000e-03 : f32
    %79 = vector.broadcast %cst_25 : f32 to vector<1x128xf32>
    %80 = arith.mulf %78, %79 : vector<1x128xf32>
    %81 = vector.shape_cast %80 : vector<1x128xf32> to vector<1x1x128xf32>
    %c0_26 = arith.constant 0 : index
    %c0_27 = arith.constant 0 : index
    %c0_28 = arith.constant 0 : index
    %82 = vector.load %arg8[%c0_26, %c0_27, %c0_28] : memref<1x1x128xf32, #tpu.memory_space<vmem>>, vector<1x1x128xf32>
    tpu.vector_store %arg8[%c0_26, %c0_27, %c0_28], %81 {strides = array<i32>} : memref<1x1x128xf32, #tpu.memory_space<vmem>>, vector<1x1x128xf32>,
    return
  }
  func.func @transform_0(%arg0: i32) -> (i32, i32) {
    %c0_i32 = arith.constant 0 : i32
    %c0_i32_0 = arith.constant 0 : i32
    return %c0_i32, %arg0 : i32, i32
  }
  func.func @transform_1(%arg0: i32) -> (i32, i32) {
    %c0_i32 = arith.constant 0 : i32
    %c0_i32_0 = arith.constant 0 : i32
    return %arg0, %c0_i32 : i32, i32
  }
  func.func @transform_2(%arg0: i32) -> (i32, i32) {
    %c0_i32 = arith.constant 0 : i32
    %c0_i32_0 = arith.constant 0 : i32
    %c0_i32_1 = arith.constant 0 : i32
    return %c0_i32, %c0_i32_0 : i32, i32
  }
  func.func @transform_3(%arg0: i32) -> (i32, i32) {
    %c0_i32 = arith.constant 0 : i32
    %c0_i32_0 = arith.constant 0 : i32
    %c0_i32_1 = arith.constant 0 : i32
    return %c0_i32, %c0_i32_0 : i32, i32
  }
  func.func @transform_4(%arg0: i32) -> (i32, i32) {
    %c0_i32 = arith.constant 0 : i32
    %c0_i32_0 = arith.constant 0 : i32
    %c0_i32_1 = arith.constant 0 : i32
    return %c0_i32, %c0_i32_0 : i32, i32
  }
  func.func @transform_5(%arg0: i32) -> (i32, i32) {
    %c0_i32 = arith.constant 0 : i32
    %c0_i32_0 = arith.constant 0 : i32
    %c0_i32_1 = arith.constant 0 : i32
    return %c0_i32, %c0_i32_0 : i32, i32
  }
  func.func @transform_6(%arg0: i32) -> (i32, i32) {
    %c0_i32 = arith.constant 0 : i32
    %c0_i32_0 = arith.constant 0 : i32
    %c0_i32_1 = arith.constant 0 : i32
    return %c0_i32, %c0_i32_0 : i32, i32
  }
  func.func @transform_7(%arg0: i32) -> (i32, i32, i32) {
    %c0_i32 = arith.constant 0 : i32
    %c0_i32_0 = arith.constant 0 : i32
    %c0_i32_1 = arith.constant 0 : i32
    return %arg0, %c0_i32, %c0_i32_0 : i32, i32, i32
  }
}

</mosaic_0001>

<llo_original>
// kernel: tpu_custom_call.1
$region0: #{tpu_custom_call.1}
  #allocation0 [shape = 'u32[]', space=smem, size = 0x4, offset = 0x4, fixed_abs, tag = 'smem constant byte address 0x4 - core index']
  #allocation1 [shape = 'u32[72,128]{1,0:T(1,128)}', space=vmem, size = 0x9000, scoped, tag = 'internal scratch']
  %s0 = inlined_call_operand.vmem [shape: s32[1,512], index: 0, kind: input, shape index: {}]
  %s1 = inlined_call_operand.vmem [shape: f32[512,65], index: 1, kind: input, shape index: {}]
  %s2 = inlined_call_operand.vmem [shape: f32[32,65], index: 2, kind: input, shape index: {}]
  %s3 = inlined_call_operand.vmem [shape: f32[32,1], index: 3, kind: input, shape index: {}]
  %s4 = inlined_call_operand.vmem [shape: f32[32,36], index: 4, kind: input, shape index: {}]
  %s5 = inlined_call_operand.vmem [shape: f32[4,32], index: 5, kind: input, shape index: {}]
  %s6 = inlined_call_operand.vmem [shape: f32[4,1], index: 6, kind: input, shape index: {}]
  %s7 = inlined_call_operand.hbm [shape: f32[4,1,128], index: 7, kind: output, shape index: {}]
  %s8 = sld [smem:[#allocation0]]
  $region61: #{tpu_custom_call.1} parent=0
    _
  %s10 = ssub.s32 1, %s8
  %s11 = scalar_select 0, %s10, %s8
  $region1: #{tpu_custom_call.1} parent=0
    #allocation2 [shape = 'u8[1024]{0}', space=vmem, size = 0x400, scoped, tag = 'output window, operand 0']
    #allocation3 [shape = 's32[2]{0}', space=sflag, size = 0x8, scoped, tag = 'scoped memory for tpu_custom_call.1']
    %12 = vsyncpa [#allocation3], 0
    %s13 = scalar_lea.sflag [#allocation3], 1
    %14 = vsyncpa %s13, 0
    loop: start=0, step=1, limit=6
    $region2: #{tpu_custom_call.1} parent=1 // loop_pre_header
      _
    $region3: #{tpu_custom_call.1} parent=1 // loop_header
      %s16 = sphi 0, %s20
      %p17 = scmp.ge.s32.totalorder %s16, 6
      %s26 = sphi 0, %s28
      %s29 = sphi 0, %s26
      %s30 = sphi 0, %s29
      %s46 = sphi 0, %s30
      %s52 = sphi 0, %s54
      %s55 = sphi 0, %s52
      %s56 = sphi 0, %s55
      %s72 = sphi 0, %s56
      %s76 = sphi 0, %s76
      %s78 = sphi 0, %s76
      %s79 = sphi 0, %s78
      %s93 = sphi 0, %s79
      %s97 = sphi 0, %s97
      %s99 = sphi 0, %s97
      %s100 = sphi 0, %s99
      %s114 = sphi 0, %s100
      %s118 = sphi 0, %s118
      %s120 = sphi 0, %s118
      %s121 = sphi 0, %s120
      %s135 = sphi 0, %s121
      %s139 = sphi 0, %s139
      %s141 = sphi 0, %s139
      %s142 = sphi 0, %s141
      %s156 = sphi 0, %s142
      %s160 = sphi 0, %s160
      %s162 = sphi 0, %s160
      %s163 = sphi 0, %s162
      %s177 = sphi 0, %s163
      %s183 = sphi 0, %s185
      %s186 = sphi 0, %s183
      %s187 = sphi 0, %s186
      %s203 = sphi 0, %s187
    $region4: #{tpu_custom_call.1} parent=1 // loop_header_branch
      %19 = sbr.rel (%p17) target = $region8
    $region5: #{tpu_custom_call.1} parent=1 // loop_body
      %s21 = ssub.s32 %s16, 1
      %s22 = ssub.s32 %s16, 2
      %s23 = sadd.s32 %s16, 1
      %s24 = ssub.s32 %s16, %s23
      %p25 = scmp.eq.s32.totalorder %s24, 0
      %s27 = sadd.s32 %s26, 1
      %s28 = scalar_select %p25, %s26, %s27
      %p31 = pneg %p25
      %p32 = scmp.eq.s32.totalorder %s16, 3
      %p33 = por %p31, %p32
      %p34 = scmp.ne.s32.totalorder %s26, %s29
      %p35 = scmp.eq.s32.totalorder %s16, 0
      %p36 = por %p34, %p35
      %p37 = scmp.ne.s32.totalorder %s26, %s29
      %p38 = scmp.eq.s32.totalorder %s21, 3
      %p39 = por %p37, %p38
      %p40 = scmp.ne.s32.totalorder %s29, %s30
      %p41 = scmp.eq.s32.totalorder %s21, 0
      %p42 = por %p40, %p41
      %p43 = scmp.ne.s32.totalorder %s29, %s30
      %p44 = scmp.eq.s32.totalorder %s22, 3
      %p45 = por %p43, %p44
      %p47 = scmp.ne.s32.totalorder %s30, %s46
      %p48 = scmp.eq.s32.totalorder %s22, 0
      %p49 = por %p47, %p48
      %s50 = ssub.s32 %s16, %s23
      %p51 = scmp.eq.s32.totalorder %s50, 0
      %s53 = sadd.s32 %s52, 1
      %s54 = scalar_select %p51, %s52, %s53
      %p57 = pneg %p51
      %p58 = scmp.eq.s32.totalorder %s16, 3
      %p59 = por %p57, %p58
      %p60 = scmp.ne.s32.totalorder %s52, %s55
      %p61 = scmp.eq.s32.totalorder %s16, 0
      %p62 = por %p60, %p61
      %p63 = scmp.ne.s32.totalorder %s52, %s55
      %p64 = scmp.eq.s32.totalorder %s21, 3
      %p65 = por %p63, %p64
      %p66 = scmp.ne.s32.totalorder %s55, %s56
      %p67 = scmp.eq.s32.totalorder %s21, 0
      %p68 = por %p66, %p67
      %p69 = scmp.ne.s32.totalorder %s55, %s56
      %p70 = scmp.eq.s32.totalorder %s22, 3
      %p71 = por %p69, %p70
      %p73 = scmp.ne.s32.totalorder %s56, %s72
      %p74 = scmp.eq.s32.totalorder %s22, 0
      %p75 = por %p73, %p74
      %s77 = sadd.s32 %s76, 1
      %p80 = scmp.eq.s32.totalorder %s16, 3
      %p81 = scmp.ne.s32.totalorder %s76, %s78
      %p82 = scmp.eq.s32.totalorder %s16, 0
      %p83 = por %p81, %p82
      %p84 = scmp.ne.s32.totalorder %s76, %s78
      %p85 = scmp.eq.s32.totalorder %s21, 3
      %p86 = por %p84, %p85
      %p87 = scmp.ne.s32.totalorder %s78, %s79
      %p88 = scmp.eq.s32.totalorder %s21, 0
      %p89 = por %p87, %p88
      %p90 = scmp.ne.s32.totalorder %s78, %s79
      %p91 = scmp.eq.s32.totalorder %s22, 3
      %p92 = por %p90, %p91
      %p94 = scmp.ne.s32.totalorder %s79, %s93
      %p95 = scmp.eq.s32.totalorder %s22, 0
      %p96 = por %p94, %p95
      %s98 = sadd.s32 %s97, 1
      %p101 = scmp.eq.s32.totalorder %s16, 3
      %p102 = scmp.ne.s32.totalorder %s97, %s99
      %p103 = scmp.eq.s32.totalorder %s16, 0
      %p104 = por %p102, %p103
      %p105 = scmp.ne.s32.totalorder %s97, %s99
      %p106 = scmp.eq.s32.totalorder %s21, 3
      %p107 = por %p105, %p106
      %p108 = scmp.ne.s32.totalorder %s99, %s100
      %p109 = scmp.eq.s32.totalorder %s21, 0
      %p110 = por %p108, %p109
      %p111 = scmp.ne.s32.totalorder %s99, %s100
      %p112 = scmp.eq.s32.totalorder %s22, 3
      %p113 = por %p111, %p112
      %p115 = scmp.ne.s32.totalorder %s100, %s114
      %p116 = scmp.eq.s32.totalorder %s22, 0
      %p117 = por %p115, %p116
      %s119 = sadd.s32 %s118, 1
      %p122 = scmp.eq.s32.totalorder %s16, 3
      %p123 = scmp.ne.s32.totalorder %s118, %s120
      %p124 = scmp.eq.s32.totalorder %s16, 0
      %p125 = por %p123, %p124
      %p126 = scmp.ne.s32.totalorder %s118, %s120
      %p127 = scmp.eq.s32.totalorder %s21, 3
      %p128 = por %p126, %p127
      %p129 = scmp.ne.s32.totalorder %s120, %s121
      %p130 = scmp.eq.s32.totalorder %s21, 0
      %p131 = por %p129, %p130
      %p132 = scmp.ne.s32.totalorder %s120, %s121
      %p133 = scmp.eq.s32.totalorder %s22, 3
      %p134 = por %p132, %p133
      %p136 = scmp.ne.s32.totalorder %s121, %s135
      %p137 = scmp.eq.s32.totalorder %s22, 0
      %p138 = por %p136, %p137
      %s140 = sadd.s32 %s139, 1
      %p143 = scmp.eq.s32.totalorder %s16, 3
      %p144 = scmp.ne.s32.totalorder %s139, %s141
      %p145 = scmp.eq.s32.totalorder %s16, 0
      %p146 = por %p144, %p145
      %p147 = scmp.ne.s32.totalorder %s139, %s141
      %p148 = scmp.eq.s32.totalorder %s21, 3
      %p149 = por %p147, %p148
      %p150 = scmp.ne.s32.totalorder %s141, %s142
      %p151 = scmp.eq.s32.totalorder %s21, 0
      %p152 = por %p150, %p151
      %p153 = scmp.ne.s32.totalorder %s141, %s142
      %p154 = scmp.eq.s32.totalorder %s22, 3
      %p155 = por %p153, %p154
      %p157 = scmp.ne.s32.totalorder %s142, %s156
      %p158 = scmp.eq.s32.totalorder %s22, 0
      %p159 = por %p157, %p158
      %s161 = sadd.s32 %s160, 1
      %p164 = scmp.eq.s32.totalorder %s16, 3
      %p165 = scmp.ne.s32.totalorder %s160, %s162
      %p166 = scmp.eq.s32.totalorder %s16, 0
      %p167 = por %p165, %p166
      %p168 = scmp.ne.s32.totalorder %s160, %s162
      %p169 = scmp.eq.s32.totalorder %s21, 3
      %p170 = por %p168, %p169
      %p171 = scmp.ne.s32.totalorder %s162, %s163
      %p172 = scmp.eq.s32.totalorder %s21, 0
      %p173 = por %p171, %p172
      %p174 = scmp.ne.s32.totalorder %s162, %s163
      %p175 = scmp.eq.s32.totalorder %s22, 3
      %p176 = por %p174, %p175
      %p178 = scmp.ne.s32.totalorder %s163, %s177
      %p179 = scmp.eq.s32.totalorder %s22, 0
      %p180 = por %p178, %p179
      %s181 = ssub.s32 %s16, %s23
      %p182 = scmp.eq.s32.totalorder %s181, 0
      %s184 = sadd.s32 %s183, 1
      %s185 = scalar_select %p182, %s183, %s184
      %p188 = pneg %p182
      %p189 = scmp.eq.s32.totalorder %s16, 3
      %p190 = por %p188, %p189
      %p191 = scmp.ne.s32.totalorder %s183, %s186
      %p192 = scmp.eq.s32.totalorder %s16, 0
      %p193 = por %p191, %p192
      %p194 = scmp.ne.s32.totalorder %s183, %s186
      %p195 = scmp.eq.s32.totalorder %s21, 3
      %p196 = por %p194, %p195
      %p197 = scmp.ne.s32.totalorder %s186, %s187
      %p198 = scmp.eq.s32.totalorder %s21, 0
      %p199 = por %p197, %p198
      %p200 = scmp.ne.s32.totalorder %s186, %s187
      %p201 = scmp.eq.s32.totalorder %s22, 3
      %p202 = por %p200, %p201
      %p204 = scmp.ne.s32.totalorder %s187, %s203
      %p205 = scmp.eq.s32.totalorder %s22, 0
      %p206 = por %p204, %p205
      %p207 = scmp.le.s32.totalorder 1, %s16
      %p208 = scmp.lt.s32.totalorder %s16, 5
      %p209 = pnand %p207, %p208
      %p210 = pneg %p209
      // Predicated region
      $region9: #{tpu_custom_call.1} parent=5 // pred_check
        _
      $region10: #{tpu_custom_call.1} parent=5 // pred_check_branch
        %212 = sbr.rel (%p209) target = $region12
      $region11: #{tpu_custom_call.1} parent=5 // pred_region
        %s213 = ssub.s32 %s16, 1
        // Predicated region
        $region13: #{tpu_custom_call.1} parent=11 // pred_check
          %p214 = pneg %p89
        $region14: #{tpu_custom_call.1} parent=11 // pred_check_branch
          %216 = sbr.rel (%p214) target = $region16
        $region15: #{tpu_custom_call.1} parent=11 // pred_region
          _
        $region16: #{tpu_custom_call.1} parent=11 // pred_fallthru
          _
        // Predicated region
        $region17: #{tpu_custom_call.1} parent=11 // pred_check
          %p217 = pneg %p110
        $region18: #{tpu_custom_call.1} parent=11 // pred_check_branch
          %219 = sbr.rel (%p217) target = $region20
        $region19: #{tpu_custom_call.1} parent=11 // pred_region
          _
        $region20: #{tpu_custom_call.1} parent=11 // pred_fallthru
          _
        // Predicated region
        $region21: #{tpu_custom_call.1} parent=11 // pred_check
          %p220 = pneg %p131
        $region22: #{tpu_custom_call.1} parent=11 // pred_check_branch
          %222 = sbr.rel (%p220) target = $region24
        $region23: #{tpu_custom_call.1} parent=11 // pred_region
          _
        $region24: #{tpu_custom_call.1} parent=11 // pred_fallthru
          _
        // Predicated region
        $region25: #{tpu_custom_call.1} parent=11 // pred_check
          %p223 = pneg %p152
        $region26: #{tpu_custom_call.1} parent=11 // pred_check_branch
          %225 = sbr.rel (%p223) target = $region28
        $region27: #{tpu_custom_call.1} parent=11 // pred_region
          _
        $region28: #{tpu_custom_call.1} parent=11 // pred_fallthru
          _
        // Predicated region
        $region29: #{tpu_custom_call.1} parent=11 // pred_check
          %p226 = pneg %p173
        $region30: #{tpu_custom_call.1} parent=11 // pred_check_branch
          %228 = sbr.rel (%p226) target = $region32
        $region31: #{tpu_custom_call.1} parent=11 // pred_region
          _
        $region32: #{tpu_custom_call.1} parent=11 // pred_fallthru
          _
      $region12: #{tpu_custom_call.1} parent=5 // pred_fallthru
        _
      %p229 = scmp.lt.s32.totalorder %s16, 4
      // Predicated region
      $region33: #{tpu_custom_call.1} parent=5 // pred_check
        %p230 = pneg %p229
      $region34: #{tpu_custom_call.1} parent=5 // pred_check_branch
        %232 = sbr.rel (%p230) target = $region36
      $region35: #{tpu_custom_call.1} parent=5 // pred_region
        // Predicated region
        $region37: #{tpu_custom_call.1} parent=35 // pred_check
          %p233 = pneg %p36
        $region38: #{tpu_custom_call.1} parent=35 // pred_check_branch
          %235 = sbr.rel (%p233) target = $region40
        $region39: #{tpu_custom_call.1} parent=35 // pred_region
          %p236 = scmp.lt.s32.totalorder %s16, 3
          %s237 = scalar_select %p236, %s16, 3
          %s238 = scalar_lea.vmem %s0, %s237
        $region40: #{tpu_custom_call.1} parent=35 // pred_fallthru
          _
        // Predicated region
        $region41: #{tpu_custom_call.1} parent=35 // pred_check
          %p239 = pneg %p62
        $region42: #{tpu_custom_call.1} parent=35 // pred_check_branch
          %241 = sbr.rel (%p239) target = $region44
        $region43: #{tpu_custom_call.1} parent=35 // pred_region
          %s242 = smul.u32 16, %s16
          %p243 = scmp.lt.s32.totalorder %s242, 63
          %s244 = scalar_select %p243, %s242, 63
          %s245 = smul.addr %s244, 8
          %s246 = scalar_lea.vmem %s1, %s245
          %s247 = smul.u32 16, %s16
        $region44: #{tpu_custom_call.1} parent=35 // pred_fallthru
          _
      $region36: #{tpu_custom_call.1} parent=5 // pred_fallthru
        _
      %p248 = scmp.le.s32.totalorder 1, %s16
      %p249 = scmp.lt.s32.totalorder %s16, 5
      %p250 = pnand %p248, %p249
      %p251 = pneg %p250
      // Predicated region
      $region45: #{tpu_custom_call.1} parent=5 // pred_check
        _
      $region46: #{tpu_custom_call.1} parent=5 // pred_check_branch
        %253 = sbr.rel (%p250) target = $region48
      $region47: #{tpu_custom_call.1} parent=5 // pred_region
        %s254 = ssub.s32 %s16, 1
        %p255 = scmp.lt.s32.totalorder %s21, 3
        %s256 = scalar_select %p255, %s21, 3
        %s257 = scalar_lea.vmem %s0, %s256
        %p258 = pneg %p42
        %p259 = pneg %p39
        %s260 = smul.u32 16, %s21
        %p261 = scmp.lt.s32.totalorder %s260, 63
        %s262 = scalar_select %p261, %s260, 63
        %s263 = smul.addr %s262, 8
        %s264 = scalar_lea.vmem %s1, %s263
        %p265 = pneg %p68
        %p266 = pneg %p65
        %p267 = pneg %p89
        %p268 = pneg %p86
        %p269 = pneg %p110
        %p270 = pneg %p107
        %p271 = pneg %p131
        %p272 = pneg %p128
        %p273 = pneg %p152
        %p274 = pneg %p149
        %p275 = pneg %p173
        %p276 = pneg %p170
        %p277 = pneg %p199
        %p278 = pneg %p196
        %s279 = sand.u32 %s186, 1
        %s280 = scalar_lea.sflag [#allocation3], %s279
        %s281 = sand.u32 %s186, 1
        %s282 = scalar_lea.vmem [#allocation2], %s281
        %p283 = scmp.lt.s32.totalorder %s21, 3
        %s284 = scalar_select %p283, %s21, 3
        %s285 = scalar_lea.vmem %s0, %s284
        %s286 = smul.u32 16, %s21
        %p287 = scmp.lt.s32.totalorder %s286, 63
        %s288 = scalar_select %p287, %s286, 63
        %s289 = smul.addr %s288, 8
        %s290 = scalar_lea.vmem %s1, %s289
        %s291 = smul.u32 16, %s21
        %v292 = vld [vmem:[%s285] sm:$0x1]
        %v293 = vld [vmem:[%s290] sm:$0xff]
        %v294 = vld [vmem:[%s290 + $0x8] sm:$0xff]
        %v295 = vld [vmem:[%s290 + $0x10] sm:$0xff]
        %v296 = vld [vmem:[%s290 + $0x18] sm:$0xff]
        %v297 = vld [vmem:[%s290 + $0x20] sm:$0xff]
        %v298 = vld [vmem:[%s290 + $0x28] sm:$0xff]
        %v299 = vld [vmem:[%s290 + $0x30] sm:$0xff]
        %v300 = vld [vmem:[%s290 + $0x38] sm:$0xff]
        %v301 = vld [vmem:[%s290 + $0x40] sm:$0xff]
        %v302 = vld [vmem:[%s290 + $0x48] sm:$0xff]
        %v303 = vld [vmem:[%s290 + $0x50] sm:$0xff]
        %v304 = vld [vmem:[%s290 + $0x58] sm:$0xff]
        %v305 = vld [vmem:[%s290 + $0x60] sm:$0xff]
        %v306 = vld [vmem:[%s290 + $0x68] sm:$0xff]
        %v307 = vld [vmem:[%s290 + $0x70] sm:$0xff]
        %v308 = vld [vmem:[%s290 + $0x78] sm:$0xff]
        %vm309 = vcmp.eq.s32.totalorder %v292, 0
        %v310 = vsel %vm309, 1, 0
        %v311 = vcvt.s32.f32 %v310
        %vm312 = vcmp.eq.s32.totalorder %v292, 1
        %v313 = vsel %vm312, 1, 0
        %v314 = vcvt.s32.f32 %v313
        %vm315 = vcmp.eq.s32.totalorder %v292, 2
        %v316 = vsel %vm315, 1, 0
        %v317 = vcvt.s32.f32 %v316
        %vm318 = vcmp.eq.s32.totalorder %v292, 3
        %v319 = vsel %vm318, 1, 0
        %v320 = vcvt.s32.f32 %v319
        %v322 = vperm.slane %v314, 0
        %v325 = vperm.slane %v317, 0
        %v328 = vperm.slane %v320, 0
        %vm330 = vcmask 1040384
        %v331 = vsel %vm330, %v311, %v322
        %vm332 = vcmask 1041408
        %v333 = vsel %vm332, %v331, %v325
        %vm334 = vcmask 1042432
        %v335 = vsel %vm334, %v333, %v328
        %v336 = vld [vmem:[%s2] sm:$0xff]
        %v337 = vld [vmem:[%s2 + $0x8] sm:$0xff]
        %v338 = vld [vmem:[%s2 + $0x10] sm:$0xff]
        %v339 = vld [vmem:[%s2 + $0x18] sm:$0xff]
        %v340 = vld [vmem:[%s3] sm:$0xff]
        %v341 = vld [vmem:[%s3 + $0x8] sm:$0xff]
        %v342 = vld [vmem:[%s3 + $0x10] sm:$0xff]
        %v343 = vld [vmem:[%s3 + $0x18] sm:$0xff]
        %345 = vset.pattern.permute.xlu0 0
        %346 = vperm.xlu0 %345, %v340
        %v347 = vpop.permute.xlu0 %346
        %350 = vset.pattern.permute.xlu0 0
        %351 = vperm.xlu0 %350, %v341
        %v352 = vpop.permute.xlu0 %351
        %355 = vset.pattern.permute.xlu0 0
        %356 = vperm.xlu0 %355, %v342
        %v357 = vpop.permute.xlu0 %356
        %360 = vset.pattern.permute.xlu0 0
        %361 = vperm.xlu0 %360, %v343
        %v362 = vpop.permute.xlu0 %361
        %vm364 = vcmask 531456
        %v366 = vsel %vm364, %v336, 0
        %v369 = vsel %vm364, %v337, 0
        %v372 = vsel %vm364, %v338, 0
        %v375 = vsel %vm364, %v339, 0
        %v378 = vsel %vm364, %v293, 0
        %v381 = vsel %vm364, %v294, 0
        %v384 = vsel %vm364, %v295, 0
        %v387 = vsel %vm364, %v296, 0
        %v390 = vsel %vm364, %v297, 0
        %v393 = vsel %vm364, %v298, 0
        %v396 = vsel %vm364, %v299, 0
        %v399 = vsel %vm364, %v300, 0
        %v402 = vsel %vm364, %v301, 0
        %v405 = vsel %vm364, %v302, 0
        %v408 = vsel %vm364, %v303, 0
        %v411 = vsel %vm364, %v304, 0
        %v414 = vsel %vm364, %v305, 0
        %v417 = vsel %vm364, %v306, 0
        %v420 = vsel %vm364, %v307, 0
        %v423 = vsel %vm364, %v308, 0
        %425 = vmatpush.xpose.msra.mxu0 %v423
        %426 = vmatpush.xpose.msra.mxu0 %v420
        %427 = vmatpush.xpose.msra.mxu0 %v417
        %428 = vmatpush.xpose.msra.mxu0 %v414
        %429 = vmatpush.xpose.msra.mxu0 %v411
        %430 = vmatpush.xpose.msra.mxu0 %v408
        %431 = vmatpush.xpose.msra.mxu0 %v405
        %432 = vmatpush.xpose.msra.mxu0 %v402
        %433 = vmatpush.xpose.msra.mxu0 %v399
        %434 = vmatpush.xpose.msra.mxu0 %v396
        %435 = vmatpush.xpose.msra.mxu0 %v393
        %436 = vmatpush.xpose.msra.mxu0 %v390
        %437 = vmatpush.xpose.msra.mxu0 %v387
        %438 = vmatpush.xpose.msra.mxu0 %v384
        %439 = vmatpush.xpose.msra.mxu0 %v381
        %440 = vmatpush.xpose.msra.mxu0 %v378
        %441 = vmatmul.f32.gmra.mxu0 %v366
        %v442 = vpop.f32.mrf.mxu0
        %v443 = vadd.f32 %v347, %v442
        %444 = vmatmul.f32.gmra.mxu0 %v369
        %v445 = vpop.f32.mrf.mxu0
        %v446 = vadd.f32 %v352, %v445
        %447 = vmatmul.f32.gmra.mxu0 %v372
        %v448 = vpop.f32.mrf.mxu0
        %v449 = vadd.f32 %v357, %v448
        %450 = vmatmul.f32.gmra.mxu0 %v375
        %v451 = vpop.f32.mrf.mxu0
        %v452 = vadd.f32 %v362, %v451
        %453 = vdwg.mxu0
        %v455 = vperm.slane %v311, 0
        %v457 = vmul.f32 %v443, %v455
        %v458 = vmul.f32 %v446, %v322
        %v459 = vadd.f32 %v457, %v458
        %v460 = vmul.f32 %v449, %v325
        %v461 = vadd.f32 %v459, %v460
        %v462 = vmul.f32 %v452, %v328
        %v463 = vadd.f32 %v461, %v462
        %v464 = vmax.f32 %v463, 0.0
        %v465 = vmin.f32 %v464, 1.0
        %v466 = vmul.f32 %v465, 127.0
        %v467 = vfloor.f32 %v466
        %v468 = vmul.f32 %v467, 0.007874016
        %v469 = vmul.f32 %v468, %v455
        %v470 = vmul.f32 %v468, %v322
        %v471 = vmul.f32 %v468, %v325
        %v472 = vmul.f32 %v468, %v328
        %v473 = vld [vmem:[%s4] sm:$0xff]
        %v474 = vld [vmem:[%s4 + $0x8] sm:$0xff]
        %v475 = vld [vmem:[%s4 + $0x10] sm:$0xff]
        %v476 = vld [vmem:[%s4 + $0x18] sm:$0xff]
        %vm477 = vcmask 293888
        %v479 = vsel %vm477, %v473, 0
        %v482 = vsel %vm477, %v474, 0
        %v485 = vsel %vm477, %v475, 0
        %v488 = vsel %vm477, %v476, 0
        %vm490 = vcmask 1043456
        %v492 = vsel %vm490, %v335, 0
        %494 = vmatpush.msra.mxu0 0.0
        %495 = vmatpush.msra.mxu0 0.0
        %496 = vmatpush.msra.mxu0 0.0
        %497 = vmatpush.msra.mxu0 0.0
        %498 = vmatpush.msra.mxu0 0.0
        %499 = vmatpush.msra.mxu0 0.0
        %500 = vmatpush.msra.mxu0 0.0
        %501 = vmatpush.msra.mxu0 0.0
        %502 = vmatpush.msra.mxu0 0.0
        %503 = vmatpush.msra.mxu0 0.0
        %504 = vmatpush.msra.mxu0 0.0
        %505 = vmatpush.msra.mxu0 %v492
        %506 = vmatpush.msra.mxu0 %v472
        %507 = vmatpush.msra.mxu0 %v471
        %508 = vmatpush.msra.mxu0 %v470
        %509 = vmatpush.msra.mxu0 %v469
        %510 = vmatmul.f32.gmra.mxu0 %v479
        %v511 = vpop.f32.mrf.mxu0
        %v512 = vadd.f32 0.0, %v511
        %513 = vmatmul.f32.gmra.mxu0 %v482
        %v514 = vpop.f32.mrf.mxu0
        %v515 = vadd.f32 0.0, %v514
        %516 = vmatmul.f32.gmra.mxu0 %v485
        %v517 = vpop.f32.mrf.mxu0
        %v518 = vadd.f32 0.0, %v517
        %519 = vmatmul.f32.gmra.mxu0 %v488
        %v520 = vpop.f32.mrf.mxu0
        %v521 = vadd.f32 0.0, %v520
        %522 = vdwg.mxu0
        %v523 = vmax.f32 %v512, 0.0
        %v524 = vmax.f32 %v515, 0.0
        %v525 = vmax.f32 %v518, 0.0
        %v526 = vmax.f32 %v521, 0.0
        %v527 = vmin.f32 %v523, 1.0
        %v528 = vmin.f32 %v524, 1.0
        %v529 = vmin.f32 %v525, 1.0
        %v530 = vmin.f32 %v526, 1.0
        %v531 = vmul.f32 %v527, 127.0
        %v532 = vmul.f32 %v528, 127.0
        %v533 = vmul.f32 %v529, 127.0
        %v534 = vmul.f32 %v530, 127.0
        %v535 = vfloor.f32 %v531
        %v536 = vfloor.f32 %v532
        %v537 = vfloor.f32 %v533
        %v538 = vfloor.f32 %v534
        %v539 = vmul.f32 %v535, 0.007874016
        %v540 = vmul.f32 %v536, 0.007874016
        %v541 = vmul.f32 %v537, 0.007874016
        %v542 = vmul.f32 %v538, 0.007874016
        %v543 = vld [vmem:[%s5] sm:$0xf]
        %v544 = vld [vmem:[%s6] sm:$0xf]
        %546 = vset.pattern.permute.xlu0 0
        %547 = vperm.xlu0 %546, %v544
        %v548 = vpop.permute.xlu0 %547
        %vm550 = vcmask 261120
        %v552 = vsel %vm550, %v543, 0
        %554 = vmatpush.msra.mxu0 0.0
        %555 = vmatpush.msra.mxu0 0.0
        %556 = vmatpush.msra.mxu0 0.0
        %557 = vmatpush.msra.mxu0 0.0
        %558 = vmatpush.msra.mxu0 0.0
        %559 = vmatpush.msra.mxu0 0.0
        %560 = vmatpush.msra.mxu0 0.0
        %561 = vmatpush.msra.mxu0 0.0
        %562 = vmatpush.msra.mxu0 0.0
        %563 = vmatpush.msra.mxu0 0.0
        %564 = vmatpush.msra.mxu0 0.0
        %565 = vmatpush.msra.mxu0 0.0
        %566 = vmatpush.msra.mxu0 %v542
        %567 = vmatpush.msra.mxu0 %v541
        %568 = vmatpush.msra.mxu0 %v540
        %569 = vmatpush.msra.mxu0 %v539
        %570 = vmatmul.f32.gmra.mxu0 %v552
        %v571 = vpop.f32.mrf.mxu0
        %v572 = vadd.f32 %v548, %v571
        %573 = vdwg.mxu0
        %v574 = vmul.f32 %v572, %v335
        %v575 = vsel %vm490, %v574, 0.0
        %v576 = vrot.slane %v575, 4
        %v577 = vadd.f32 %v575, %v576
        %v578 = vrot.slane %v577, 2
        %v579 = vadd.f32 %v577, %v578
        %v580 = vrot.slane %v579, 1
        %v581 = vadd.f32 %v579, %v580
        %v582 = vmul.f32 %v581, 400.0
        %v583 = vfloor.f32 %v582
        %v584 = vmul.f32 %v583, 0.0025
        %585 = vst [vmem:[%s282] sm:$0x1] %v584
        %s586 = sand.u32 %s186, 1
        %s587 = scalar_lea.sflag [#allocation3], %s586
        %s588 = sand.u32 %s186, 1
        %s589 = scalar_lea.vmem [#allocation2], %s588
        // Predicated region
        $region49: #{tpu_custom_call.1} parent=47 // pred_check
          %p590 = pneg %p196
        $region50: #{tpu_custom_call.1} parent=47 // pred_check_branch
          %592 = sbr.rel (%p590) target = $region52
        $region51: #{tpu_custom_call.1} parent=47 // pred_region
          %594 = vsyncadd %s587, 0
          %s595 = scalar_lea.hbm %s7, %s21
          %s597 = sshll.u32 %s589, 4
          %s598 = int_to_ptr.vmem [resolvable:$true] %s597
          %s599 = sshll.u32 %s595, 4
          %s600 = int_to_ptr.hbm [resolvable:$true] %s599
          %602 = dma.vmem_to_hbm [thread:$0]  %s598, 16, %s600, %s587
        $region52: #{tpu_custom_call.1} parent=47 // pred_fallthru
          _
      $region48: #{tpu_custom_call.1} parent=5 // pred_fallthru
        _
      %p603 = scmp.le.s32.totalorder 2, %s16
      // Predicated region
      $region53: #{tpu_custom_call.1} parent=5 // pred_check
        %p604 = pneg %p603
      $region54: #{tpu_custom_call.1} parent=5 // pred_check_branch
        %606 = sbr.rel (%p604) target = $region56
      $region55: #{tpu_custom_call.1} parent=5 // pred_region
        %s607 = ssub.s32 %s16, 2
        // Predicated region
        $region57: #{tpu_custom_call.1} parent=55 // pred_check
          %p608 = pneg %p202
        $region58: #{tpu_custom_call.1} parent=55 // pred_check_branch
          %610 = sbr.rel (%p608) target = $region60
        $region59: #{tpu_custom_call.1} parent=55 // pred_region
          %s611 = sand.u32 %s187, 1
          %s612 = scalar_lea.sflag [#allocation3], %s611
          %s613 = sand.u32 %s187, 1
          %s614 = scalar_lea.vmem [#allocation2], %s613
          %616 = dma.done %s612, 16
        $region60: #{tpu_custom_call.1} parent=55 // pred_fallthru
          _
      $region56: #{tpu_custom_call.1} parent=5 // pred_fallthru
        _
    $region6: #{tpu_custom_call.1} parent=1 // loop_footer
      %s20 = sadd.s32 1, %s16
    $region7: #{tpu_custom_call.1} parent=1 // loop_footer_branch
      %15 = sbr.rel target = $region3
    $region8: #{tpu_custom_call.1} parent=1 // loop_exit
      _
    %617 = vsyncpa [#allocation3], 1
    %s618 = scalar_lea.sflag [#allocation3], 1
    %619 = vsyncpa %s618, 1

</llo_original>
